<compile_context>
chip_gen: v7x
topology: tpu7x:2x2x1
jax: 0.10.0
libtpu: 0.0.40
codegen_flags: <defaults>
</compile_context>

<pallas_src>
import jax
import jax.numpy as jnp
from jax.experimental import pallas as pl
from jax.experimental.pallas import tpu as pltpu


def _round_up(n, m):
    return (n + m - 1) // m * m


def _cdiv(a, b):
    return -(-a // b)


def _mia_kernel(x_ref, lab_ref,
                w1, wl1, b01,       # layer 1: (nf,768), (nc,768) zero-padded halves
                w12, b12,           # layer 2 fused block-diag: (768, 256)
                w23, b23,           # layer 3 fused (w3 | identity): (256, 128)
                wc, bc,             # combine Linear(128, 1)
                out_ref):
    f32 = jnp.float32
    bf16 = jnp.bfloat16

    # Layer 1: both branches into one 768-wide buffer (cols 0:512 features,
    # 512:768 labels).  Two K<=128 dots == one K-slab each; exact via zero pad.
    h01 = jnp.maximum(
        jnp.dot(x_ref[...].astype(bf16), w1[...], preferred_element_type=f32)
        + jnp.dot(lab_ref[...].astype(bf16), wl1[...], preferred_element_type=f32)
        + b01[...], 0.0)

    # Layer 2 fused: cols 0:100 features hidden-2, 128:192 labels hidden-2.
    h12 = jnp.maximum(
        jnp.dot(h01.astype(bf16), w12[...], preferred_element_type=f32)
        + b12[...], 0.0)

    # Layer 3 fused: cols 0:64 = hx, 64:128 = hl (identity pass, ReLU idempotent).
    h23 = jnp.maximum(
        jnp.dot(h12.astype(bf16), w23[...], preferred_element_type=f32)
        + b23[...], 0.0)

    # Combine: concat([hx, hl]) @ wc + bc, now a single (tb,128)@(128,1) dot.
    logit = jnp.dot(h23.astype(bf16), wc[...], preferred_element_type=f32) + bc[...]

    out_ref[...] = jax.nn.sigmoid(logit)


def mia_forward(x, label, kernel_params, *, batch_tile=2048):
    """x: (B, num_features) f32, label: (B, num_classes) f32 -> (B, 1) f32."""
    B, nf = x.shape
    nc = label.shape[1]

    # Balanced batch tile: multiple of 8, <= batch_tile, padding spread across
    # blocks so B slightly above a tile multiple doesn't waste ~a full tile.
    nblk = max(1, _cdiv(B, batch_tile))
    tb = max(8, _round_up(_cdiv(B, nblk), 8))
    B_pad = _round_up(B, tb)
    nblocks = B_pad // tb

    if B_pad != B:
        pad = B_pad - B
        x = jnp.pad(x, ((0, pad), (0, 0)))          # padded rows sliced off below
        label = jnp.pad(label, ((0, pad), (0, 0)))

    in_specs = [pl.BlockSpec((tb, nf), lambda i: (i, 0)),
                pl.BlockSpec((tb, nc), lambda i: (i, 0))]
    # Weights/biases: full-array blocks with constant index_map -> VMEM-resident.
    in_specs += [pl.BlockSpec(p.shape, lambda i: (0, 0)) for p in kernel_params]
    out_spec = pl.BlockSpec((tb, 1), lambda i: (i, 0))

    weight_bytes = sum(int(p.size) * p.dtype.itemsize for p in kernel_params)
    flops = 2 * B_pad * (nf * 768 + nc * 768 + 768 * 256 + 256 * 128 + 128)
    cost = pl.CostEstimate(
        flops=flops,
        transcendentals=2 * B_pad,                  # sigmoid ~ exp + reciprocal
        bytes_accessed=B_pad * (nf + nc) * 4 + weight_bytes + B_pad * 4,
    )

    out = pl.pallas_call(
        _mia_kernel,
        grid=(nblocks,),
        in_specs=in_specs,
        out_specs=out_spec,
        out_shape=jax.ShapeDtypeStruct((B_pad, 1), jnp.float32),
        compiler_params=pltpu.CompilerParams(
            dimension_semantics=("parallel",),      # megacore-shardable on v7x
            vmem_limit_bytes=32 * 1024 * 1024,      # safe on v5e/v6e/v7x
        ),
        cost_estimate=cost,
    )(x, label, *kernel_params)

    return out[:B]


def init_raw_params(key, num_classes, num_features=None):
    """Deterministic init mirroring nn.Linear default (uniform +-1/sqrt(fan_in)).

    Weights are stored pre-transposed as (in, out) so y = x @ W + b matches
    PyTorch's y = x @ W.T + b.
    """
    if num_features is None:
        num_features = num_classes

    def linear(k, fan_in, fan_out):
        kw, kb = jax.random.split(k)
        bound = float(1.0 / (fan_in ** 0.5))
        w = jax.random.uniform(kw, (fan_in, fan_out), jnp.float32, -bound, bound)
        b = jax.random.uniform(kb, (1, fan_out), jnp.float32, -bound, bound)
        return w, b

    keys = jax.random.split(key, 6)
    w1, b1 = linear(keys[0], num_features, 512)
    w2, b2 = linear(keys[1], 512, 100)
    w3, b3 = linear(keys[2], 100, 64)
    wl1, bl1 = linear(keys[3], num_classes, 256)
    wl2, bl2 = linear(keys[4], 256, 64)
    wc, bc = linear(keys[5], 128, 1)
    return dict(w1=w1, b1=b1, w2=w2, b2=b2, w3=w3, b3=b3,
                wl1=wl1, bl1=bl1, wl2=wl2, bl2=bl2, wc=wc, bc=bc,
                num_features=num_features, num_classes=num_classes)


def pack_kernel_params(raw):
    """Transform raw f32 module weights into the fused/padded bf16 kernel layout.

    All fusions are exact: zero padding, block-diagonal placement, and a 64x64
    identity block (ReLU is idempotent on the already-nonnegative labels branch).
    """
    bf16, f32 = jnp.bfloat16, jnp.float32
    nf, nc = raw["num_features"], raw["num_classes"]

    # Layer 1: zero-padded halves of the 768-wide fused hidden-1.
    w1 = jnp.zeros((nf, 768), f32).at[:, :512].set(raw["w1"])
    wl1 = jnp.zeros((nc, 768), f32).at[:, 512:].set(raw["wl1"])
    b01 = jnp.concatenate([raw["b1"], raw["bl1"]], axis=1)          # (1, 768)

    # Layer 2 fused block-diagonal (768, 256): w2 (100->128 pad) | wl2 in 128:192.
    w12 = jnp.zeros((768, 256), f32)
    w12 = w12.at[:512, :100].set(raw["w2"])
    w12 = w12.at[512:, 128:192].set(raw["wl2"])
    b12 = jnp.zeros((1, 256), f32)
    b12 = b12.at[:, :100].set(raw["b2"])
    b12 = b12.at[:, 128:192].set(raw["bl2"])

    # Layer 3 fused (256, 128): w3 into cols 0:64, identity pass of hl into 64:128.
    w23 = jnp.zeros((256, 128), f32)
    w23 = w23.at[:100, :64].set(raw["w3"])
    w23 = w23.at[128:192, 64:128].set(jnp.eye(64, dtype=f32))
    b23 = jnp.zeros((1, 128), f32).at[:, :64].set(raw["b3"])

    return (w1.astype(bf16), wl1.astype(bf16), b01.astype(f32),
            w12.astype(bf16), b12.astype(f32),
            w23.astype(bf16), b23.astype(f32),
            raw["wc"].astype(bf16), raw["bc"].astype(f32))


def mia_reference(x, label, raw):
    """Pure-f32 JAX mirror of the PyTorch module forward (original weights)."""
    h = jax.nn.relu(x @ raw["w1"] + raw["b1"])
    h = jax.nn.relu(h @ raw["w2"] + raw["b2"])
    hx = jax.nn.relu(h @ raw["w3"] + raw["b3"])
    g = jax.nn.relu(label @ raw["wl1"] + raw["bl1"])
    hl = jax.nn.relu(g @ raw["wl2"] + raw["bl2"])
    logit = jnp.concatenate([hx, hl], axis=1) @ raw["wc"] + raw["bc"]
    return jax.nn.sigmoid(logit)


if __name__ == "__main__":
    num_classes = 10
    batch = 8

    key = jax.random.PRNGKey(0)
    k_params, k_x, k_lab = jax.random.split(key, 3)

    raw = init_raw_params(k_params, num_classes)
    kparams = pack_kernel_params(raw)

    # x_1: probabilities/logits for each class; label: one-hot true labels.
    x = jax.random.normal(k_x, (batch, num_classes), jnp.float32)
    label_idx = jax.random.randint(k_lab, (batch,), 0, num_classes)
    label = jax.nn.one_hot(label_idx, num_classes, dtype=jnp.float32)

    out = mia_forward(x, label, kparams)
    out = jax.block_until_ready(out)

    ref = mia_reference(x, label, raw)
    assert out.shape == (batch, 1), out.shape
    # bf16 matmul inputs with f32 accumulation -> relaxed tolerance vs f32 reference.
    assert jnp.allclose(out, ref, atol=3e-2, rtol=0.0), (out, ref)

    print("KERNEL_OK")
</pallas_src>

<mosaic_0001>
module attributes {stable_mosaic.version = 11 : i64} {
  func.func @_mia_kernel(%arg0: i32, %arg1: memref<8x10xf32, #tpu.memory_space<vmem>>, %arg2: memref<8x10xf32, #tpu.memory_space<vmem>>, %arg3: memref<10x768xbf16, #tpu.memory_space<vmem>>, %arg4: memref<10x768xbf16, #tpu.memory_space<vmem>>, %arg5: memref<1x768xf32, #tpu.memory_space<vmem>>, %arg6: memref<768x256xbf16, #tpu.memory_space<vmem>>, %arg7: memref<1x256xf32, #tpu.memory_space<vmem>>, %arg8: memref<256x128xbf16, #tpu.memory_space<vmem>>, %arg9: memref<1x128xf32, #tpu.memory_space<vmem>>, %arg10: memref<128x1xbf16, #tpu.memory_space<vmem>>, %arg11: memref<1x1xf32, #tpu.memory_space<vmem>>, %arg12: memref<8x1xf32, #tpu.memory_space<vmem>>) attributes {dimension_semantics = [#tpu.dimension_semantics<parallel>], iteration_bounds = array<i64: 1>, scalar_prefetch = 0 : i64, scratch_operands = 0 : i64, tpu.core_type = #tpu.core_type<tc>, window_params = [{transform_indices = @transform_0, window_bounds = array<i64: 8, 10>}, {transform_indices = @transform_1, window_bounds = array<i64: 8, 10>}, {pipeline_mode = #tpu.pipeline_mode<synchronous>, transform_indices = @transform_2, window_bounds = array<i64: 10, 768>}, {pipeline_mode = #tpu.pipeline_mode<synchronous>, transform_indices = @transform_3, window_bounds = array<i64: 10, 768>}, {pipeline_mode = #tpu.pipeline_mode<synchronous>, transform_indices = @transform_4, window_bounds = array<i64: 1, 768>}, {pipeline_mode = #tpu.pipeline_mode<synchronous>, transform_indices = @transform_5, window_bounds = array<i64: 768, 256>}, {pipeline_mode = #tpu.pipeline_mode<synchronous>, transform_indices = @transform_6, window_bounds = array<i64: 1, 256>}, {pipeline_mode = #tpu.pipeline_mode<synchronous>, transform_indices = @transform_7, window_bounds = array<i64: 256, 128>}, {pipeline_mode = #tpu.pipeline_mode<synchronous>, transform_indices = @transform_8, window_bounds = array<i64: 1, 128>}, {pipeline_mode = #tpu.pipeline_mode<synchronous>, transform_indices = @transform_9, window_bounds = array<i64: 128, 1>}, {pipeline_mode = #tpu.pipeline_mode<synchronous>, transform_indices = @transform_10, window_bounds = array<i64: 1, 1>}, {transform_indices = @transform_11, window_bounds = array<i64: 8, 1>}]} {
    %c0 = arith.constant 0 : index
    %c0_0 = arith.constant 0 : index
    %0 = vector.load %arg1[%c0, %c0_0] : memref<8x10xf32, #tpu.memory_space<vmem>>, vector<8x10xf32>
    %1 = arith.truncf %0 : vector<8x10xf32> to vector<8x10xbf16>
    %c0_1 = arith.constant 0 : index
    %c0_2 = arith.constant 0 : index
    %2 = vector.load %arg3[%c0_1, %c0_2] : memref<10x768xbf16, #tpu.memory_space<vmem>>, vector<10x768xbf16>
    %cst = arith.constant dense<0.000000e+00> : vector<8x768xf32>
    %3 = tpu.matmul %1, %2, %cst {dimension_numbers = #tpu.dot_dimension_numbers<[1], [0], [0], [1], [0, 0, 1, 1], [], []>} : vector<8x10xbf16>, vector<10x768xbf16>, vector<8x768xf32> -> vector<8x768xf32>
    %c0_3 = arith.constant 0 : index
    %c0_4 = arith.constant 0 : index
    %4 = vector.load %arg2[%c0_3, %c0_4] : memref<8x10xf32, #tpu.memory_space<vmem>>, vector<8x10xf32>
    %5 = arith.truncf %4 : vector<8x10xf32> to vector<8x10xbf16>
    %c0_5 = arith.constant 0 : index
    %c0_6 = arith.constant 0 : index
    %6 = vector.load %arg4[%c0_5, %c0_6] : memref<10x768xbf16, #tpu.memory_space<vmem>>, vector<10x768xbf16>
    %cst_7 = arith.constant dense<0.000000e+00> : vector<8x768xf32>
    %7 = tpu.matmul %5, %6, %cst_7 {dimension_numbers = #tpu.dot_dimension_numbers<[1], [0], [0], [1], [0, 0, 1, 1], [], []>} : vector<8x10xbf16>, vector<10x768xbf16>, vector<8x768xf32> -> vector<8x768xf32>
    %8 = arith.addf %3, %7 : vector<8x768xf32>
    %c0_8 = arith.constant 0 : index
    %c0_9 = arith.constant 0 : index
    %9 = vector.load %arg5[%c0_8, %c0_9] : memref<1x768xf32, #tpu.memory_space<vmem>>, vector<1x768xf32>
    %10 = vector.broadcast %9 : vector<1x768xf32> to vector<8x768xf32>
    %11 = arith.addf %8, %10 : vector<8x768xf32>
    %cst_10 = arith.constant 0.000000e+00 : f32
    %12 = vector.broadcast %cst_10 : f32 to vector<8x768xf32>
    %13 = arith.maximumf %11, %12 : vector<8x768xf32>
    %14 = arith.truncf %13 : vector<8x768xf32> to vector<8x768xbf16>
    %c0_11 = arith.constant 0 : index
    %c0_12 = arith.constant 0 : index
    %15 = vector.load %arg6[%c0_11, %c0_12] : memref<768x256xbf16, #tpu.memory_space<vmem>>, vector<768x256xbf16>
    %cst_13 = arith.constant dense<0.000000e+00> : vector<8x256xf32>
    %16 = tpu.matmul %14, %15, %cst_13 {dimension_numbers = #tpu.dot_dimension_numbers<[1], [0], [0], [1], [0, 0, 1, 1], [], []>} : vector<8x768xbf16>, vector<768x256xbf16>, vector<8x256xf32> -> vector<8x256xf32>
    %c0_14 = arith.constant 0 : index
    %c0_15 = arith.constant 0 : index
    %17 = vector.load %arg7[%c0_14, %c0_15] : memref<1x256xf32, #tpu.memory_space<vmem>>, vector<1x256xf32>
    %18 = vector.broadcast %17 : vector<1x256xf32> to vector<8x256xf32>
    %19 = arith.addf %16, %18 : vector<8x256xf32>
    %cst_16 = arith.constant 0.000000e+00 : f32
    %20 = vector.broadcast %cst_16 : f32 to vector<8x256xf32>
    %21 = arith.maximumf %19, %20 : vector<8x256xf32>
    %22 = arith.truncf %21 : vector<8x256xf32> to vector<8x256xbf16>
    %c0_17 = arith.constant 0 : index
    %c0_18 = arith.constant 0 : index
    %23 = vector.load %arg8[%c0_17, %c0_18] : memref<256x128xbf16, #tpu.memory_space<vmem>>, vector<256x128xbf16>
    %cst_19 = arith.constant dense<0.000000e+00> : vector<8x128xf32>
    %24 = tpu.matmul %22, %23, %cst_19 {dimension_numbers = #tpu.dot_dimension_numbers<[1], [0], [0], [1], [0, 0, 1, 1], [], []>} : vector<8x256xbf16>, vector<256x128xbf16>, vector<8x128xf32> -> vector<8x128xf32>
    %c0_20 = arith.constant 0 : index
    %c0_21 = arith.constant 0 : index
    %25 = vector.load %arg9[%c0_20, %c0_21] : memref<1x128xf32, #tpu.memory_space<vmem>>, vector<1x128xf32>
    %26 = vector.broadcast %25 : vector<1x128xf32> to vector<8x128xf32>
    %27 = arith.addf %24, %26 : vector<8x128xf32>
    %cst_22 = arith.constant 0.000000e+00 : f32
    %28 = vector.broadcast %cst_22 : f32 to vector<8x128xf32>
    %29 = arith.maximumf %27, %28 : vector<8x128xf32>
    %30 = arith.truncf %29 : vector<8x128xf32> to vector<8x128xbf16>
    %c0_23 = arith.constant 0 : index
    %c0_24 = arith.constant 0 : index
    %31 = vector.load %arg10[%c0_23, %c0_24] : memref<128x1xbf16, #tpu.memory_space<vmem>>, vector<128x1xbf16>
    %cst_25 = arith.constant dense<0.000000e+00> : vector<8x1xf32>
    %32 = tpu.matmul %30, %31, %cst_25 {dimension_numbers = #tpu.dot_dimension_numbers<[1], [0], [0], [1], [0, 0, 1, 1], [], []>} : vector<8x128xbf16>, vector<128x1xbf16>, vector<8x1xf32> -> vector<8x1xf32>
    %c0_26 = arith.constant 0 : index
    %c0_27 = arith.constant 0 : index
    %33 = vector.load %arg11[%c0_26, %c0_27] : memref<1x1xf32, #tpu.memory_space<vmem>>, vector<1x1xf32>
    %34 = vector.broadcast %33 : vector<1x1xf32> to vector<8x1xf32>
    %35 = arith.addf %32, %34 : vector<8x1xf32>
    %36 = arith.negf %35 : vector<8x1xf32>
    %37 = math.exp %36 : vector<8x1xf32>
    %cst_28 = arith.constant 1.000000e+00 : f32
    %38 = vector.broadcast %cst_28 : f32 to vector<8x1xf32>
    %39 = arith.addf %38, %37 : vector<8x1xf32>
    %40 = arith.divf %38, %39 : vector<8x1xf32>
    %c0_29 = arith.constant 0 : index
    %c0_30 = arith.constant 0 : index
    %41 = vector.load %arg12[%c0_29, %c0_30] : memref<8x1xf32, #tpu.memory_space<vmem>>, vector<8x1xf32>
    tpu.vector_store %arg12[%c0_29, %c0_30], %40 {strides = array<i32>} : memref<8x1xf32, #tpu.memory_space<vmem>>, vector<8x1xf32>,
    return
  }
  func.func @transform_0(%arg0: i32) -> (i32, i32) {
    %c0_i32 = arith.constant 0 : i32
    %c0_i32_0 = arith.constant 0 : i32
    return %arg0, %c0_i32 : i32, i32
  }
  func.func @transform_1(%arg0: i32) -> (i32, i32) {
    %c0_i32 = arith.constant 0 : i32
    %c0_i32_0 = arith.constant 0 : i32
    return %arg0, %c0_i32 : i32, i32
  }
  func.func @transform_2(%arg0: i32) -> (i32, i32) {
    %c0_i32 = arith.constant 0 : i32
    %c0_i32_0 = arith.constant 0 : i32
    %c0_i32_1 = arith.constant 0 : i32
    return %c0_i32, %c0_i32_0 : i32, i32
  }
  func.func @transform_3(%arg0: i32) -> (i32, i32) {
    %c0_i32 = arith.constant 0 : i32
    %c0_i32_0 = arith.constant 0 : i32
    %c0_i32_1 = arith.constant 0 : i32
    return %c0_i32, %c0_i32_0 : i32, i32
  }
  func.func @transform_4(%arg0: i32) -> (i32, i32) {
    %c0_i32 = arith.constant 0 : i32
    %c0_i32_0 = arith.constant 0 : i32
    %c0_i32_1 = arith.constant 0 : i32
    return %c0_i32, %c0_i32_0 : i32, i32
  }
  func.func @transform_5(%arg0: i32) -> (i32, i32) {
    %c0_i32 = arith.constant 0 : i32
    %c0_i32_0 = arith.constant 0 : i32
    %c0_i32_1 = arith.constant 0 : i32
    return %c0_i32, %c0_i32_0 : i32, i32
  }
  func.func @transform_6(%arg0: i32) -> (i32, i32) {
    %c0_i32 = arith.constant 0 : i32
    %c0_i32_0 = arith.constant 0 : i32
    %c0_i32_1 = arith.constant 0 : i32
    return %c0_i32, %c0_i32_0 : i32, i32
  }
  func.func @transform_7(%arg0: i32) -> (i32, i32) {
    %c0_i32 = arith.constant 0 : i32
    %c0_i32_0 = arith.constant 0 : i32
    %c0_i32_1 = arith.constant 0 : i32
    return %c0_i32, %c0_i32_0 : i32, i32
  }
  func.func @transform_8(%arg0: i32) -> (i32, i32) {
    %c0_i32 = arith.constant 0 : i32
    %c0_i32_0 = arith.constant 0 : i32
    %c0_i32_1 = arith.constant 0 : i32
    return %c0_i32, %c0_i32_0 : i32, i32
  }
  func.func @transform_9(%arg0: i32) -> (i32, i32) {
    %c0_i32 = arith.constant 0 : i32
    %c0_i32_0 = arith.constant 0 : i32
    %c0_i32_1 = arith.constant 0 : i32
    return %c0_i32, %c0_i32_0 : i32, i32
  }
  func.func @transform_10(%arg0: i32) -> (i32, i32) {
    %c0_i32 = arith.constant 0 : i32
    %c0_i32_0 = arith.constant 0 : i32
    %c0_i32_1 = arith.constant 0 : i32
    return %c0_i32, %c0_i32_0 : i32, i32
  }
  func.func @transform_11(%arg0: i32) -> (i32, i32) {
    %c0_i32 = arith.constant 0 : i32
    %c0_i32_0 = arith.constant 0 : i32
    return %arg0, %c0_i32 : i32, i32
  }
}

</mosaic_0001>

<llo_original>
// kernel: tpu_custom_call.1
$region0: #{tpu_custom_call.1}
  #allocation0 [shape = 'u32[]', space=smem, size = 0x4, offset = 0x4, fixed_abs, tag = 'smem constant byte address 0x4 - core index']
  #allocation1 [shape = 'u32[144,128]{1,0:T(1,128)}', space=vmem, size = 0x12000, scoped, tag = 'internal scratch']
  #allocation2 [shape = 'f32[1,1]{1,0:T(1,128)S(1)}', space=vmem, size = 0x200, scoped, tag = 'scoped memory for tpu_custom_call.1']
  %s0 = inlined_call_operand.vmem [shape: f32[8,10], index: 0, kind: input, shape index: {}]
  %s1 = inlined_call_operand.vmem [shape: f32[8,10], index: 1, kind: input, shape index: {}]
  %s2 = inlined_call_operand.vmem [shape: bf16[10,768], index: 2, kind: input, shape index: {}]
  %s3 = inlined_call_operand.hbm [shape: bf16[10,768], index: 3, kind: input, shape index: {}]
  %s4 = inlined_call_operand.vmem [shape: f32[1,768], index: 4, kind: input, shape index: {}]
  %s5 = inlined_call_operand.hbm [shape: bf16[768,256], index: 5, kind: input, shape index: {}]
  %s6 = inlined_call_operand.vmem [shape: f32[1,256], index: 6, kind: input, shape index: {}]
  %s7 = inlined_call_operand.hbm [shape: bf16[256,128], index: 7, kind: input, shape index: {}]
  %s8 = inlined_call_operand.vmem [shape: f32[1,128], index: 8, kind: input, shape index: {}]
  %s9 = inlined_call_operand.vmem [shape: bf16[128,1], index: 9, kind: input, shape index: {}]
  %s10 = inlined_call_operand.<no memory space> [shape: f32[1,1], index: 10, kind: input, shape index: {}]
  %s11 = inlined_call_operand.vmem [shape: f32[8,1], index: 11, kind: output, shape index: {}]
  %s12 = sld [smem:[#allocation0]]
  $region66: #{tpu_custom_call.1} parent=0
    _
  %s14 = ssub.s32 1, %s12
  %s15 = scalar_select 0, %s14, %s12
  %v16 = vstv %s10
  %17 = vst [vmem:[#allocation2] sm:$0x1] %v16
  $region1: #{tpu_custom_call.1} parent=0
    #allocation3 [shape = 'u8[24576]{0}', space=vmem, size = 0x6000, scoped, tag = 'input window, operand 3, single buffered']
    #allocation4 [shape = 's32[1]{0}', space=sflag, size = 0x4, scoped, tag = 'scoped memory for tpu_custom_call.1']
    #allocation5 [shape = 'u8[393216]{0}', space=vmem, size = 0x60000, scoped, tag = 'input window, operand 5, single buffered']
    #allocation6 [shape = 's32[1]{0}', space=sflag, size = 0x4, scoped, tag = 'scoped memory for tpu_custom_call.1']
    #allocation7 [shape = 'u8[65536]{0}', space=vmem, size = 0x10000, scoped, tag = 'input window, operand 7, single buffered']
    %18 = vsyncpa [#allocation4], 0
    %19 = vsyncpa [#allocation6], 0
    // Predicated region
    $region2: #{tpu_custom_call.1} parent=1 // pred_check
      _
    $region3: #{tpu_custom_call.1} parent=1 // pred_check_branch
      %21 = sbr.rel (0) target = $region5
    $region4: #{tpu_custom_call.1} parent=1 // pred_region
      _
    $region5: #{tpu_custom_call.1} parent=1 // pred_fallthru
      _
    // Predicated region
    $region6: #{tpu_custom_call.1} parent=1 // pred_check
      _
    $region7: #{tpu_custom_call.1} parent=1 // pred_check_branch
      %23 = sbr.rel (0) target = $region9
    $region8: #{tpu_custom_call.1} parent=1 // pred_region
      _
    $region9: #{tpu_custom_call.1} parent=1 // pred_fallthru
      _
    // Predicated region
    $region10: #{tpu_custom_call.1} parent=1 // pred_check
      _
    $region11: #{tpu_custom_call.1} parent=1 // pred_check_branch
      %25 = sbr.rel (0) target = $region13
    $region12: #{tpu_custom_call.1} parent=1 // pred_region
      _
    $region13: #{tpu_custom_call.1} parent=1 // pred_fallthru
      _
    // Predicated region
    $region14: #{tpu_custom_call.1} parent=1 // pred_check
      _
    $region15: #{tpu_custom_call.1} parent=1 // pred_check_branch
      %27 = sbr.rel (0) target = $region17
    $region16: #{tpu_custom_call.1} parent=1 // pred_region
      %s29 = ssub.s32 768, 768
      %30 = vsyncadd [#allocation4], %s29
      %s31 = sshll.u32 [#allocation3], 4
      %s32 = int_to_ptr.vmem [resolvable:$true] %s31
      %37 = dma.hbm_to_vmem [thread:$0]  %s3, 768, %s32, [#allocation4], 384, 384, 24
    $region17: #{tpu_custom_call.1} parent=1 // pred_fallthru
      _
    // Predicated region
    $region18: #{tpu_custom_call.1} parent=1 // pred_check
      _
    $region19: #{tpu_custom_call.1} parent=1 // pred_check_branch
      %39 = sbr.rel (0) target = $region21
    $region20: #{tpu_custom_call.1} parent=1 // pred_region
      _
    $region21: #{tpu_custom_call.1} parent=1 // pred_fallthru
      _
    // Predicated region
    $region22: #{tpu_custom_call.1} parent=1 // pred_check
      _
    $region23: #{tpu_custom_call.1} parent=1 // pred_check_branch
      %41 = sbr.rel (0) target = $region25
    $region24: #{tpu_custom_call.1} parent=1 // pred_region
      %s43 = ssub.s32 12288, 12288
      %44 = vsyncadd [#allocation6], %s43
      %s45 = sshll.u32 [#allocation5], 4
      %s46 = int_to_ptr.vmem [resolvable:$true] %s45
      %51 = dma.hbm_to_vmem [thread:$0]  %s5, 12288, %s46, [#allocation6], 128, 128, 8
    $region25: #{tpu_custom_call.1} parent=1 // pred_fallthru
      _
    // Predicated region
    $region26: #{tpu_custom_call.1} parent=1 // pred_check
      _
    $region27: #{tpu_custom_call.1} parent=1 // pred_check_branch
      %53 = sbr.rel (0) target = $region29
    $region28: #{tpu_custom_call.1} parent=1 // pred_region
      _
    $region29: #{tpu_custom_call.1} parent=1 // pred_fallthru
      _
    // Predicated region
    $region30: #{tpu_custom_call.1} parent=1 // pred_check
      _
    $region31: #{tpu_custom_call.1} parent=1 // pred_check_branch
      %55 = sbr.rel (0) target = $region33
    $region32: #{tpu_custom_call.1} parent=1 // pred_region
      %s57 = ssub.s32 2048, 2048
      %58 = vsyncadd [#allocation6], %s57
      %s59 = sshll.u32 [#allocation7], 4
      %s60 = int_to_ptr.vmem [resolvable:$true] %s59
      %65 = dma.hbm_to_vmem [thread:$0]  %s7, 2048, %s60, [#allocation6], 64, 64, 4
    $region33: #{tpu_custom_call.1} parent=1 // pred_fallthru
      _
    // Predicated region
    $region34: #{tpu_custom_call.1} parent=1 // pred_check
      _
    $region35: #{tpu_custom_call.1} parent=1 // pred_check_branch
      %67 = sbr.rel (0) target = $region37
    $region36: #{tpu_custom_call.1} parent=1 // pred_region
      _
    $region37: #{tpu_custom_call.1} parent=1 // pred_fallthru
      _
    // Predicated region
    $region38: #{tpu_custom_call.1} parent=1 // pred_check
      _
    $region39: #{tpu_custom_call.1} parent=1 // pred_check_branch
      %69 = sbr.rel (0) target = $region41
    $region40: #{tpu_custom_call.1} parent=1 // pred_region
      _
    $region41: #{tpu_custom_call.1} parent=1 // pred_fallthru
      _
    // Predicated region
    $region42: #{tpu_custom_call.1} parent=1 // pred_check
      _
    $region43: #{tpu_custom_call.1} parent=1 // pred_check_branch
      %71 = sbr.rel (0) target = $region45
    $region44: #{tpu_custom_call.1} parent=1 // pred_region
      _
    $region45: #{tpu_custom_call.1} parent=1 // pred_fallthru
      _
    // Predicated region
    $region46: #{tpu_custom_call.1} parent=1 // pred_check
      _
    $region47: #{tpu_custom_call.1} parent=1 // pred_check_branch
      %73 = sbr.rel (0) target = $region49
    $region48: #{tpu_custom_call.1} parent=1 // pred_region
      %74 = dma.done [#allocation4], 768
    $region49: #{tpu_custom_call.1} parent=1 // pred_fallthru
      _
    // Predicated region
    $region50: #{tpu_custom_call.1} parent=1 // pred_check
      _
    $region51: #{tpu_custom_call.1} parent=1 // pred_check_branch
      %76 = sbr.rel (0) target = $region53
    $region52: #{tpu_custom_call.1} parent=1 // pred_region
      %77 = dma.done [#allocation6], 12288
    $region53: #{tpu_custom_call.1} parent=1 // pred_fallthru
      _
    // Predicated region
    $region54: #{tpu_custom_call.1} parent=1 // pred_check
      _
    $region55: #{tpu_custom_call.1} parent=1 // pred_check_branch
      %79 = sbr.rel (0) target = $region57
    $region56: #{tpu_custom_call.1} parent=1 // pred_region
      %80 = dma.done [#allocation6], 2048
    $region57: #{tpu_custom_call.1} parent=1 // pred_fallthru
      _
    %v82 = vld [vmem:[%s0] sm:$0xff]
    %v83 = vpack.c.bf16 %v82, %v82
    %v84 = vld [vmem:[%s2] sm:$0xff]
    %v85 = vld [vmem:[%s2 + $0x8] sm:$0xff]
    %v86 = vld [vmem:[%s2 + $0x10] sm:$0xff]
    %v87 = vld [vmem:[%s2 + $0x18] sm:$0x11]
    %v88 = vld [vmem:[%s2 + $0x20] sm:$0x11]
    %v89 = vld [vmem:[%s2 + $0x28] sm:$0x11]
    %v90 = vld [vmem:[%s1] sm:$0xff]
    %v91 = vpack.c.bf16 %v90, %v90
    %v92 = vld [vmem:[#allocation3] sm:$0xff]
    %v93 = vld [vmem:[#allocation3 + $0x8] sm:$0xff]
    %v94 = vld [vmem:[#allocation3 + $0x10] sm:$0xff]
    %v95 = vld [vmem:[#allocation3 + $0x18] sm:$0x11]
    %v96 = vld [vmem:[#allocation3 + $0x20] sm:$0x11]
    %v97 = vld [vmem:[#allocation3 + $0x28] sm:$0x11]
    %v104 = vunpack.c.l.b16 %v92
    %v105 = vunpack.c.h.b16 %v92
    %v106 = vunpack.c.l.b16 %v93
    %v107 = vunpack.c.h.b16 %v93
    %v108 = vunpack.c.l.b16 %v94
    %v109 = vunpack.c.h.b16 %v94
    %v110 = vunpack.c.l.b16 %v95
    %v111 = vunpack.c.h.b16 %v95
    %v112 = vunpack.c.l.b16 %v96
    %v113 = vunpack.c.h.b16 %v96
    %v114 = vunpack.c.l.b16 %v97
    %v115 = vunpack.c.h.b16 %v97
    %v116 = vpack.c.b16 %v110, %v104
    %v117 = vpack.c.b16 %v111, %v105
    %v118 = vpack.c.b16 %v112, %v106
    %v119 = vpack.c.b16 %v113, %v107
    %v120 = vpack.c.b16 %v114, %v108
    %v121 = vpack.c.b16 %v115, %v109
    %vm122 = vcmask 80896
    %v124 = vsel %vm122, %v91, 0
    %vm126 = vcmask 1044480
    %v128 = vsel %vm126, %v116, 0
    %v131 = vsel %vm126, %v117, 0
    %v134 = vsel %vm126, %v118, 0
    %v137 = vsel %vm126, %v119, 0
    %v140 = vsel %vm126, %v120, 0
    %v143 = vsel %vm126, %v121, 0
    %145 = vmatprep.subr.bf16.mxu0 %v131
    %146 = vmatpush1.bf16.msra.mxu0 %v128
    %147 = vmatprep.subr.bf16.mxu0 0
    %148 = vmatpush1.bf16.msra.mxu0 0
    %149 = vmatprep.subr.bf16.mxu0 0
    %150 = vmatpush1.bf16.msra.mxu0 0
    %151 = vmatprep.subr.bf16.mxu0 0
    %152 = vmatpush1.bf16.msra.mxu0 0
    %153 = vmatprep.subr.bf16.mxu0 0
    %154 = vmatpush1.bf16.msra.mxu0 0
    %155 = vmatprep.subr.bf16.mxu0 0
    %156 = vmatpush1.bf16.msra.mxu0 0
    %157 = vmatprep.subr.bf16.mxu0 0
    %158 = vmatpush1.bf16.msra.mxu0 0
    %159 = vmatprep.subr.bf16.mxu0 0
    %160 = vmatpush1.bf16.msra.mxu0 0
    %161 = vmatprep.subr.bf16.mxu0 0
    %162 = vmatpush1.bf16.msra.mxu0 0
    %163 = vmatprep.subr.bf16.mxu0 0
    %164 = vmatpush1.bf16.msra.mxu0 0
    %165 = vmatprep.subr.bf16.mxu0 0
    %166 = vmatpush1.bf16.msra.mxu0 0
    %167 = vmatprep.subr.bf16.mxu0 0
    %168 = vmatpush1.bf16.msra.mxu0 0
    %169 = vmatprep.subr.bf16.mxu0 0
    %170 = vmatpush1.bf16.msra.mxu0 0
    %171 = vmatprep.subr.bf16.mxu0 0
    %172 = vmatpush1.bf16.msra.mxu0 0
    %173 = vmatprep.subr.bf16.mxu0 0
    %174 = vmatpush1.bf16.msra.mxu0 0
    %175 = vmatprep.subr.bf16.mxu0 0
    %176 = vmatpush1.bf16.msra.mxu0 0
    %177 = vmatprep.mubr.bf16.mxu0 0
    %178 = vmatmul.mubr.bf16.gmra.mrb[0].mxu0 %v124
    %v179 = vpop.f32.mrb[0].mxu0
    %v180 = vadd.f32 0.0, %v179
    %v181 = vpop.f32.mrb[0].mxu0
    %v182 = vadd.f32 0.0, %v181
    %v183 = vpop.f32.mrb[0].mxu0
    %v184 = vpop.f32.mrb[0].mxu0
    %185 = vdwg.mxu0
    %186 = vmatprep.subr.bf16.mxu0 %v137
    %187 = vmatpush1.bf16.msra.mxu0 %v134
    %188 = vmatprep.subr.bf16.mxu0 0
    %189 = vmatpush1.bf16.msra.mxu0 0
    %190 = vmatprep.subr.bf16.mxu0 0
    %191 = vmatpush1.bf16.msra.mxu0 0
    %192 = vmatprep.subr.bf16.mxu0 0
    %193 = vmatpush1.bf16.msra.mxu0 0
    %194 = vmatprep.subr.bf16.mxu0 0
    %195 = vmatpush1.bf16.msra.mxu0 0
    %196 = vmatprep.subr.bf16.mxu0 0
    %197 = vmatpush1.bf16.msra.mxu0 0
    %198 = vmatprep.subr.bf16.mxu0 0
    %199 = vmatpush1.bf16.msra.mxu0 0
    %200 = vmatprep.subr.bf16.mxu0 0
    %201 = vmatpush1.bf16.msra.mxu0 0
    %202 = vmatprep.subr.bf16.mxu0 0
    %203 = vmatpush1.bf16.msra.mxu0 0
    %204 = vmatprep.subr.bf16.mxu0 0
    %205 = vmatpush1.bf16.msra.mxu0 0
    %206 = vmatprep.subr.bf16.mxu0 0
    %207 = vmatpush1.bf16.msra.mxu0 0
    %208 = vmatprep.subr.bf16.mxu0 0
    %209 = vmatpush1.bf16.msra.mxu0 0
    %210 = vmatprep.subr.bf16.mxu0 0
    %211 = vmatpush1.bf16.msra.mxu0 0
    %212 = vmatprep.subr.bf16.mxu0 0
    %213 = vmatpush1.bf16.msra.mxu0 0
    %214 = vmatprep.subr.bf16.mxu0 0
    %215 = vmatpush1.bf16.msra.mxu0 0
    %216 = vmatprep.subr.bf16.mxu0 0
    %217 = vmatpush1.bf16.msra.mxu0 0
    %218 = vmatprep.mubr.bf16.mxu0 0
    %219 = vmatmul.mubr.bf16.gmra.mrb[0].mxu0 %v124
    %v220 = vpop.f32.mrb[0].mxu0
    %v221 = vadd.f32 0.0, %v220
    %v222 = vpop.f32.mrb[0].mxu0
    %v223 = vadd.f32 0.0, %v222
    %v224 = vpop.f32.mrb[0].mxu0
    %v225 = vpop.f32.mrb[0].mxu0
    %226 = vdwg.mxu0
    %227 = vmatprep.subr.bf16.mxu0 %v143
    %228 = vmatpush1.bf16.msra.mxu0 %v140
    %229 = vmatprep.subr.bf16.mxu0 0
    %230 = vmatpush1.bf16.msra.mxu0 0
    %231 = vmatprep.subr.bf16.mxu0 0
    %232 = vmatpush1.bf16.msra.mxu0 0
    %233 = vmatprep.subr.bf16.mxu0 0
    %234 = vmatpush1.bf16.msra.mxu0 0
    %235 = vmatprep.subr.bf16.mxu0 0
    %236 = vmatpush1.bf16.msra.mxu0 0
    %237 = vmatprep.subr.bf16.mxu0 0
    %238 = vmatpush1.bf16.msra.mxu0 0
    %239 = vmatprep.subr.bf16.mxu0 0
    %240 = vmatpush1.bf16.msra.mxu0 0
    %241 = vmatprep.subr.bf16.mxu0 0
    %242 = vmatpush1.bf16.msra.mxu0 0
    %243 = vmatprep.subr.bf16.mxu0 0
    %244 = vmatpush1.bf16.msra.mxu0 0
    %245 = vmatprep.subr.bf16.mxu0 0
    %246 = vmatpush1.bf16.msra.mxu0 0
    %247 = vmatprep.subr.bf16.mxu0 0
    %248 = vmatpush1.bf16.msra.mxu0 0
    %249 = vmatprep.subr.bf16.mxu0 0
    %250 = vmatpush1.bf16.msra.mxu0 0
    %251 = vmatprep.subr.bf16.mxu0 0
    %252 = vmatpush1.bf16.msra.mxu0 0
    %253 = vmatprep.subr.bf16.mxu0 0
    %254 = vmatpush1.bf16.msra.mxu0 0
    %255 = vmatprep.subr.bf16.mxu0 0
    %256 = vmatpush1.bf16.msra.mxu0 0
    %257 = vmatprep.subr.bf16.mxu0 0
    %258 = vmatpush1.bf16.msra.mxu0 0
    %259 = vmatprep.mubr.bf16.mxu0 0
    %260 = vmatmul.mubr.bf16.gmra.mrb[0].mxu0 %v124
    %v261 = vpop.f32.mrb[0].mxu0
    %v262 = vadd.f32 0.0, %v261
    %v263 = vpop.f32.mrb[0].mxu0
    %v264 = vadd.f32 0.0, %v263
    %v265 = vpop.f32.mrb[0].mxu0
    %v266 = vpop.f32.mrb[0].mxu0
    %267 = vdwg.mxu0
    %v274 = vunpack.c.l.b16 %v84
    %v275 = vunpack.c.h.b16 %v84
    %v276 = vunpack.c.l.b16 %v85
    %v277 = vunpack.c.h.b16 %v85
    %v278 = vunpack.c.l.b16 %v86
    %v279 = vunpack.c.h.b16 %v86
    %v280 = vunpack.c.l.b16 %v87
    %v281 = vunpack.c.h.b16 %v87
    %v282 = vunpack.c.l.b16 %v88
    %v283 = vunpack.c.h.b16 %v88
    %v284 = vunpack.c.l.b16 %v89
    %v285 = vunpack.c.h.b16 %v89
    %v286 = vpack.c.b16 %v280, %v274
    %v287 = vpack.c.b16 %v281, %v275
    %v288 = vpack.c.b16 %v282, %v276
    %v289 = vpack.c.b16 %v283, %v277
    %v290 = vpack.c.b16 %v284, %v278
    %v291 = vpack.c.b16 %v285, %v279
    %v293 = vsel %vm122, %v83, 0
    %v296 = vsel %vm126, %v286, 0
    %v299 = vsel %vm126, %v287, 0
    %v302 = vsel %vm126, %v288, 0
    %v305 = vsel %vm126, %v289, 0
    %v308 = vsel %vm126, %v290, 0
    %v311 = vsel %vm126, %v291, 0
    %313 = vmatprep.subr.bf16.mxu0 %v299
    %314 = vmatpush1.bf16.msra.mxu0 %v296
    %315 = vmatprep.subr.bf16.mxu0 0
    %316 = vmatpush1.bf16.msra.mxu0 0
    %317 = vmatprep.subr.bf16.mxu0 0
    %318 = vmatpush1.bf16.msra.mxu0 0
    %319 = vmatprep.subr.bf16.mxu0 0
    %320 = vmatpush1.bf16.msra.mxu0 0
    %321 = vmatprep.subr.bf16.mxu0 0
    %322 = vmatpush1.bf16.msra.mxu0 0
    %323 = vmatprep.subr.bf16.mxu0 0
    %324 = vmatpush1.bf16.msra.mxu0 0
    %325 = vmatprep.subr.bf16.mxu0 0
    %326 = vmatpush1.bf16.msra.mxu0 0
    %327 = vmatprep.subr.bf16.mxu0 0
    %328 = vmatpush1.bf16.msra.mxu0 0
    %329 = vmatprep.subr.bf16.mxu0 0
    %330 = vmatpush1.bf16.msra.mxu0 0
    %331 = vmatprep.subr.bf16.mxu0 0
    %332 = vmatpush1.bf16.msra.mxu0 0
    %333 = vmatprep.subr.bf16.mxu0 0
    %334 = vmatpush1.bf16.msra.mxu0 0
    %335 = vmatprep.subr.bf16.mxu0 0
    %336 = vmatpush1.bf16.msra.mxu0 0
    %337 = vmatprep.subr.bf16.mxu0 0
    %338 = vmatpush1.bf16.msra.mxu0 0
    %339 = vmatprep.subr.bf16.mxu0 0
    %340 = vmatpush1.bf16.msra.mxu0 0
    %341 = vmatprep.subr.bf16.mxu0 0
    %342 = vmatpush1.bf16.msra.mxu0 0
    %343 = vmatprep.subr.bf16.mxu0 0
    %344 = vmatpush1.bf16.msra.mxu0 0
    %345 = vmatprep.mubr.bf16.mxu0 0
    %346 = vmatmul.mubr.bf16.gmra.mrb[0].mxu0 %v293
    %v347 = vpop.f32.mrb[0].mxu0
    %v348 = vadd.f32 %v180, %v347
    %v349 = vpop.f32.mrb[0].mxu0
    %v350 = vadd.f32 %v182, %v349
    %v351 = vpop.f32.mrb[0].mxu0
    %v352 = vpop.f32.mrb[0].mxu0
    %353 = vdwg.mxu0
    %354 = vmatprep.subr.bf16.mxu0 %v305
    %355 = vmatpush1.bf16.msra.mxu0 %v302
    %356 = vmatprep.subr.bf16.mxu0 0
    %357 = vmatpush1.bf16.msra.mxu0 0
    %358 = vmatprep.subr.bf16.mxu0 0
    %359 = vmatpush1.bf16.msra.mxu0 0
    %360 = vmatprep.subr.bf16.mxu0 0
    %361 = vmatpush1.bf16.msra.mxu0 0
    %362 = vmatprep.subr.bf16.mxu0 0
    %363 = vmatpush1.bf16.msra.mxu0 0
    %364 = vmatprep.subr.bf16.mxu0 0
    %365 = vmatpush1.bf16.msra.mxu0 0
    %366 = vmatprep.subr.bf16.mxu0 0
    %367 = vmatpush1.bf16.msra.mxu0 0
    %368 = vmatprep.subr.bf16.mxu0 0
    %369 = vmatpush1.bf16.msra.mxu0 0
    %370 = vmatprep.subr.bf16.mxu0 0
    %371 = vmatpush1.bf16.msra.mxu0 0
    %372 = vmatprep.subr.bf16.mxu0 0
    %373 = vmatpush1.bf16.msra.mxu0 0
    %374 = vmatprep.subr.bf16.mxu0 0
    %375 = vmatpush1.bf16.msra.mxu0 0
    %376 = vmatprep.subr.bf16.mxu0 0
    %377 = vmatpush1.bf16.msra.mxu0 0
    %378 = vmatprep.subr.bf16.mxu0 0
    %379 = vmatpush1.bf16.msra.mxu0 0
    %380 = vmatprep.subr.bf16.mxu0 0
    %381 = vmatpush1.bf16.msra.mxu0 0
    %382 = vmatprep.subr.bf16.mxu0 0
    %383 = vmatpush1.bf16.msra.mxu0 0
    %384 = vmatprep.subr.bf16.mxu0 0
    %385 = vmatpush1.bf16.msra.mxu0 0
    %386 = vmatprep.mubr.bf16.mxu0 0
    %387 = vmatmul.mubr.bf16.gmra.mrb[0].mxu0 %v293
    %v388 = vpop.f32.mrb[0].mxu0
    %v389 = vadd.f32 %v221, %v388
    %v390 = vpop.f32.mrb[0].mxu0
    %v391 = vadd.f32 %v223, %v390
    %v392 = vpop.f32.mrb[0].mxu0
    %v393 = vpop.f32.mrb[0].mxu0
    %394 = vdwg.mxu0
    %395 = vmatprep.subr.bf16.mxu0 %v311
    %396 = vmatpush1.bf16.msra.mxu0 %v308
    %397 = vmatprep.subr.bf16.mxu0 0
    %398 = vmatpush1.bf16.msra.mxu0 0
    %399 = vmatprep.subr.bf16.mxu0 0
    %400 = vmatpush1.bf16.msra.mxu0 0
    %401 = vmatprep.subr.bf16.mxu0 0
    %402 = vmatpush1.bf16.msra.mxu0 0
    %403 = vmatprep.subr.bf16.mxu0 0
    %404 = vmatpush1.bf16.msra.mxu0 0
    %405 = vmatprep.subr.bf16.mxu0 0
    %406 = vmatpush1.bf16.msra.mxu0 0
    %407 = vmatprep.subr.bf16.mxu0 0
    %408 = vmatpush1.bf16.msra.mxu0 0
    %409 = vmatprep.subr.bf16.mxu0 0
    %410 = vmatpush1.bf16.msra.mxu0 0
    %411 = vmatprep.subr.bf16.mxu0 0
    %412 = vmatpush1.bf16.msra.mxu0 0
    %413 = vmatprep.subr.bf16.mxu0 0
    %414 = vmatpush1.bf16.msra.mxu0 0
    %415 = vmatprep.subr.bf16.mxu0 0
    %416 = vmatpush1.bf16.msra.mxu0 0
    %417 = vmatprep.subr.bf16.mxu0 0
    %418 = vmatpush1.bf16.msra.mxu0 0
    %419 = vmatprep.subr.bf16.mxu0 0
    %420 = vmatpush1.bf16.msra.mxu0 0
    %421 = vmatprep.subr.bf16.mxu0 0
    %422 = vmatpush1.bf16.msra.mxu0 0
    %423 = vmatprep.subr.bf16.mxu0 0
    %424 = vmatpush1.bf16.msra.mxu0 0
    %425 = vmatprep.subr.bf16.mxu0 0
    %426 = vmatpush1.bf16.msra.mxu0 0
    %427 = vmatprep.mubr.bf16.mxu0 0
    %428 = vmatmul.mubr.bf16.gmra.mrb[0].mxu0 %v293
    %v429 = vpop.f32.mrb[0].mxu0
    %v430 = vadd.f32 %v262, %v429
    %v431 = vpop.f32.mrb[0].mxu0
    %v432 = vadd.f32 %v264, %v431
    %v433 = vpop.f32.mrb[0].mxu0
    %v434 = vpop.f32.mrb[0].mxu0
    %435 = vdwg.mxu0
    %v436 = vld [vmem:[%s4] sm:$0x3f]
    %v438 = vlaneseq
    %v439 = vshrl.u32 %v438, 7
    %v440 = vsub.s32 0, %v439
    %v441 = vrot.slane %v436, %v440
    %v442 = vlaneseq
    %v443 = vshrl.u32 %v442, 7
    %v444 = vsub.s32 1, %v443
    %v445 = vrot.slane %v436, %v444
    %v446 = vlaneseq
    %v447 = vshrl.u32 %v446, 7
    %v448 = vsub.s32 2, %v447
    %v449 = vrot.slane %v436, %v448
    %v450 = vlaneseq
    %v451 = vshrl.u32 %v450, 7
    %v452 = vsub.s32 3, %v451
    %v453 = vrot.slane %v436, %v452
    %v454 = vlaneseq
    %v455 = vshrl.u32 %v454, 7
    %v456 = vsub.s32 4, %v455
    %v457 = vrot.slane %v436, %v456
    %v458 = vlaneseq
    %v459 = vshrl.u32 %v458, 7
    %v460 = vsub.s32 5, %v459
    %v461 = vrot.slane %v436, %v460
    %v468 = vadd.f32 %v348, %v441
    %v469 = vadd.f32 %v350, %v445
    %v470 = vadd.f32 %v389, %v449
    %v471 = vadd.f32 %v391, %v453
    %v472 = vadd.f32 %v430, %v457
    %v473 = vadd.f32 %v432, %v461
    %v474 = vmax.f32 %v468, 0.0
    %v475 = vmax.f32 %v469, 0.0
    %v476 = vmax.f32 %v470, 0.0
    %v477 = vmax.f32 %v471, 0.0
    %v478 = vmax.f32 %v472, 0.0
    %v479 = vmax.f32 %v473, 0.0
    %v480 = vpack.c.bf16 %v474, %v474
    %v481 = vpack.c.bf16 %v475, %v475
    %v482 = vpack.c.bf16 %v476, %v476
    %v483 = vpack.c.bf16 %v477, %v477
    %v484 = vpack.c.bf16 %v478, %v478
    %v485 = vpack.c.bf16 %v479, %v479
    %v486 = vld [vmem:[#allocation5] sm:$0xff]
    %v487 = vld [vmem:[#allocation5 + $0x8] sm:$0xff]
    %v488 = vld [vmem:[#allocation5 + $0x10] sm:$0xff]
    %v489 = vld [vmem:[#allocation5 + $0x18] sm:$0xff]
    %v490 = vld [vmem:[#allocation5 + $0x20] sm:$0xff]
    %v491 = vld [vmem:[#allocation5 + $0x28] sm:$0xff]
    %v492 = vld [vmem:[#allocation5 + $0x30] sm:$0xff]
    %v493 = vld [vmem:[#allocation5 + $0x38] sm:$0xff]
    %v494 = vld [vmem:[#allocation5 + $0x40] sm:$0xff]
    %v495 = vld [vmem:[#allocation5 + $0x48] sm:$0xff]
    %v496 = vld [vmem:[#allocation5 + $0x50] sm:$0xff]
    %v497 = vld [vmem:[#allocation5 + $0x58] sm:$0xff]
    %v498 = vld [vmem:[#allocation5 + $0x60] sm:$0xff]
    %v499 = vld [vmem:[#allocation5 + $0x68] sm:$0xff]
    %v500 = vld [vmem:[#allocation5 + $0x70] sm:$0xff]
    %v501 = vld [vmem:[#allocation5 + $0x78] sm:$0xff]
    %v502 = vld [vmem:[#allocation5 + $0x80] sm:$0xff]
    %v503 = vld [vmem:[#allocation5 + $0x88] sm:$0xff]
    %v504 = vld [vmem:[#allocation5 + $0x90] sm:$0xff]
    %v505 = vld [vmem:[#allocation5 + $0x98] sm:$0xff]
    %v506 = vld [vmem:[#allocation5 + $0xa0] sm:$0xff]
    %v507 = vld [vmem:[#allocation5 + $0xa8] sm:$0xff]
    %v508 = vld [vmem:[#allocation5 + $0xb0] sm:$0xff]
    %v509 = vld [vmem:[#allocation5 + $0xb8] sm:$0xff]
    %v510 = vld [vmem:[#allocation5 + $0xc0] sm:$0xff]
    %v511 = vld [vmem:[#allocation5 + $0xc8] sm:$0xff]
    %v512 = vld [vmem:[#allocation5 + $0xd0] sm:$0xff]
    %v513 = vld [vmem:[#allocation5 + $0xd8] sm:$0xff]
    %v514 = vld [vmem:[#allocation5 + $0xe0] sm:$0xff]
    %v515 = vld [vmem:[#allocation5 + $0xe8] sm:$0xff]
    %v516 = vld [vmem:[#allocation5 + $0xf0] sm:$0xff]
    %v517 = vld [vmem:[#allocation5 + $0xf8] sm:$0xff]
    %v518 = vld [vmem:[#allocation5 + $0x100] sm:$0xff]
    %v519 = vld [vmem:[#allocation5 + $0x108] sm:$0xff]
    %v520 = vld [vmem:[#allocation5 + $0x110] sm:$0xff]
    %v521 = vld [vmem:[#allocation5 + $0x118] sm:$0xff]
    %v522 = vld [vmem:[#allocation5 + $0x120] sm:$0xff]
    %v523 = vld [vmem:[#allocation5 + $0x128] sm:$0xff]
    %v524 = vld [vmem:[#allocation5 + $0x130] sm:$0xff]
    %v525 = vld [vmem:[#allocation5 + $0x138] sm:$0xff]
    %v526 = vld [vmem:[#allocation5 + $0x140] sm:$0xff]
    %v527 = vld [vmem:[#allocation5 + $0x148] sm:$0xff]
    %v528 = vld [vmem:[#allocation5 + $0x150] sm:$0xff]
    %v529 = vld [vmem:[#allocation5 + $0x158] sm:$0xff]
    %v530 = vld [vmem:[#allocation5 + $0x160] sm:$0xff]
    %v531 = vld [vmem:[#allocation5 + $0x168] sm:$0xff]
    %v532 = vld [vmem:[#allocation5 + $0x170] sm:$0xff]
    %v533 = vld [vmem:[#allocation5 + $0x178] sm:$0xff]
    %v534 = vld [vmem:[#allocation5 + $0x180] sm:$0xff]
    %v535 = vld [vmem:[#allocation5 + $0x188] sm:$0xff]
    %v536 = vld [vmem:[#allocation5 + $0x190] sm:$0xff]
    %v537 = vld [vmem:[#allocation5 + $0x198] sm:$0xff]
    %v538 = vld [vmem:[#allocation5 + $0x1a0] sm:$0xff]
    %v539 = vld [vmem:[#allocation5 + $0x1a8] sm:$0xff]
    %v540 = vld [vmem:[#allocation5 + $0x1b0] sm:$0xff]
    %v541 = vld [vmem:[#allocation5 + $0x1b8] sm:$0xff]
    %v542 = vld [vmem:[#allocation5 + $0x1c0] sm:$0xff]
    %v543 = vld [vmem:[#allocation5 + $0x1c8] sm:$0xff]
    %v544 = vld [vmem:[#allocation5 + $0x1d0] sm:$0xff]
    %v545 = vld [vmem:[#allocation5 + $0x1d8] sm:$0xff]
    %v546 = vld [vmem:[#allocation5 + $0x1e0] sm:$0xff]
    %v547 = vld [vmem:[#allocation5 + $0x1e8] sm:$0xff]
    %v548 = vld [vmem:[#allocation5 + $0x1f0] sm:$0xff]
    %v549 = vld [vmem:[#allocation5 + $0x1f8] sm:$0xff]
    %v550 = vld [vmem:[#allocation5 + $0x200] sm:$0xff]
    %v551 = vld [vmem:[#allocation5 + $0x208] sm:$0xff]
    %v552 = vld [vmem:[#allocation5 + $0x210] sm:$0xff]
    %v553 = vld [vmem:[#allocation5 + $0x218] sm:$0xff]
    %v554 = vld [vmem:[#allocation5 + $0x220] sm:$0xff]
    %v555 = vld [vmem:[#allocation5 + $0x228] sm:$0xff]
    %v556 = vld [vmem:[#allocation5 + $0x230] sm:$0xff]
    %v557 = vld [vmem:[#allocation5 + $0x238] sm:$0xff]
    %v558 = vld [vmem:[#allocation5 + $0x240] sm:$0xff]
    %v559 = vld [vmem:[#allocation5 + $0x248] sm:$0xff]
    %v560 = vld [vmem:[#allocation5 + $0x250] sm:$0xff]
    %v561 = vld [vmem:[#allocation5 + $0x258] sm:$0xff]
    %v562 = vld [vmem:[#allocation5 + $0x260] sm:$0xff]
    %v563 = vld [vmem:[#allocation5 + $0x268] sm:$0xff]
    %v564 = vld [vmem:[#allocation5 + $0x270] sm:$0xff]
    %v565 = vld [vmem:[#allocation5 + $0x278] sm:$0xff]
    %v566 = vld [vmem:[#allocation5 + $0x280] sm:$0xff]
    %v567 = vld [vmem:[#allocation5 + $0x288] sm:$0xff]
    %v568 = vld [vmem:[#allocation5 + $0x290] sm:$0xff]
    %v569 = vld [vmem:[#allocation5 + $0x298] sm:$0xff]
    %v570 = vld [vmem:[#allocation5 + $0x2a0] sm:$0xff]
    %v571 = vld [vmem:[#allocation5 + $0x2a8] sm:$0xff]
    %v572 = vld [vmem:[#allocation5 + $0x2b0] sm:$0xff]
    %v573 = vld [vmem:[#allocation5 + $0x2b8] sm:$0xff]
    %v574 = vld [vmem:[#allocation5 + $0x2c0] sm:$0xff]
    %v575 = vld [vmem:[#allocation5 + $0x2c8] sm:$0xff]
    %v576 = vld [vmem:[#allocation5 + $0x2d0] sm:$0xff]
    %v577 = vld [vmem:[#allocation5 + $0x2d8] sm:$0xff]
    %v578 = vld [vmem:[#allocation5 + $0x2e0] sm:$0xff]
    %v579 = vld [vmem:[#allocation5 + $0x2e8] sm:$0xff]
    %v580 = vld [vmem:[#allocation5 + $0x2f0] sm:$0xff]
    %v581 = vld [vmem:[#allocation5 + $0x2f8] sm:$0xff]
    %v582 = vld [vmem:[%s6] sm:$0x3]
    %v584 = vlaneseq
    %v585 = vshrl.u32 %v584, 7
    %v586 = vsub.s32 0, %v585
    %v587 = vrot.slane %v582, %v586
    %v588 = vlaneseq
    %v589 = vshrl.u32 %v588, 7
    %v590 = vsub.s32 1, %v589
    %v591 = vrot.slane %v582, %v590
    %v690 = vunpack.c.l.b16 %v486
    %v691 = vunpack.c.h.b16 %v486
    %v692 = vunpack.c.l.b16 %v487
    %v693 = vunpack.c.h.b16 %v487
    %v694 = vunpack.c.l.b16 %v488
    %v695 = vunpack.c.h.b16 %v488
    %v696 = vunpack.c.l.b16 %v489
    %v697 = vunpack.c.h.b16 %v489
    %v698 = vunpack.c.l.b16 %v490
    %v699 = vunpack.c.h.b16 %v490
    %v700 = vunpack.c.l.b16 %v491
    %v701 = vunpack.c.h.b16 %v491
    %v702 = vunpack.c.l.b16 %v492
    %v703 = vunpack.c.h.b16 %v492
    %v704 = vunpack.c.l.b16 %v493
    %v705 = vunpack.c.h.b16 %v493
    %v706 = vunpack.c.l.b16 %v494
    %v707 = vunpack.c.h.b16 %v494
    %v708 = vunpack.c.l.b16 %v495
    %v709 = vunpack.c.h.b16 %v495
    %v710 = vunpack.c.l.b16 %v496
    %v711 = vunpack.c.h.b16 %v496
    %v712 = vunpack.c.l.b16 %v497
    %v713 = vunpack.c.h.b16 %v497
    %v714 = vunpack.c.l.b16 %v498
    %v715 = vunpack.c.h.b16 %v498
    %v716 = vunpack.c.l.b16 %v499
    %v717 = vunpack.c.h.b16 %v499
    %v718 = vunpack.c.l.b16 %v500
    %v719 = vunpack.c.h.b16 %v500
    %v720 = vunpack.c.l.b16 %v501
    %v721 = vunpack.c.h.b16 %v501
    %v722 = vunpack.c.l.b16 %v502
    %v723 = vunpack.c.h.b16 %v502
    %v724 = vunpack.c.l.b16 %v503
    %v725 = vunpack.c.h.b16 %v503
    %v726 = vunpack.c.l.b16 %v504
    %v727 = vunpack.c.h.b16 %v504
    %v728 = vunpack.c.l.b16 %v505
    %v729 = vunpack.c.h.b16 %v505
    %v730 = vunpack.c.l.b16 %v506
    %v731 = vunpack.c.h.b16 %v506
    %v732 = vunpack.c.l.b16 %v507
    %v733 = vunpack.c.h.b16 %v507
    %v734 = vunpack.c.l.b16 %v508
    %v735 = vunpack.c.h.b16 %v508
    %v736 = vunpack.c.l.b16 %v509
    %v737 = vunpack.c.h.b16 %v509
    %v738 = vunpack.c.l.b16 %v510
    %v739 = vunpack.c.h.b16 %v510
    %v740 = vunpack.c.l.b16 %v511
    %v741 = vunpack.c.h.b16 %v511
    %v742 = vunpack.c.l.b16 %v512
    %v743 = vunpack.c.h.b16 %v512
    %v744 = vunpack.c.l.b16 %v513
    %v745 = vunpack.c.h.b16 %v513
    %v746 = vunpack.c.l.b16 %v514
    %v747 = vunpack.c.h.b16 %v514
    %v748 = vunpack.c.l.b16 %v515
    %v749 = vunpack.c.h.b16 %v515
    %v750 = vunpack.c.l.b16 %v516
    %v751 = vunpack.c.h.b16 %v516
    %v752 = vunpack.c.l.b16 %v517
    %v753 = vunpack.c.h.b16 %v517
    %v754 = vunpack.c.l.b16 %v518
    %v755 = vunpack.c.h.b16 %v518
    %v756 = vunpack.c.l.b16 %v519
    %v757 = vunpack.c.h.b16 %v519
    %v758 = vunpack.c.l.b16 %v520
    %v759 = vunpack.c.h.b16 %v520
    %v760 = vunpack.c.l.b16 %v521
    %v761 = vunpack.c.h.b16 %v521
    %v762 = vunpack.c.l.b16 %v522
    %v763 = vunpack.c.h.b16 %v522
    %v764 = vunpack.c.l.b16 %v523
    %v765 = vunpack.c.h.b16 %v523
    %v766 = vunpack.c.l.b16 %v524
    %v767 = vunpack.c.h.b16 %v524
    %v768 = vunpack.c.l.b16 %v525
    %v769 = vunpack.c.h.b16 %v525
    %v770 = vunpack.c.l.b16 %v526
    %v771 = vunpack.c.h.b16 %v526
    %v772 = vunpack.c.l.b16 %v527
    %v773 = vunpack.c.h.b16 %v527
    %v774 = vunpack.c.l.b16 %v528
    %v775 = vunpack.c.h.b16 %v528
    %v776 = vunpack.c.l.b16 %v529
    %v777 = vunpack.c.h.b16 %v529
    %v778 = vunpack.c.l.b16 %v530
    %v779 = vunpack.c.h.b16 %v530
    %v780 = vunpack.c.l.b16 %v531
    %v781 = vunpack.c.h.b16 %v531
    %v782 = vunpack.c.l.b16 %v532
    %v783 = vunpack.c.h.b16 %v532
    %v784 = vunpack.c.l.b16 %v533
    %v785 = vunpack.c.h.b16 %v533
    %v786 = vunpack.c.l.b16 %v534
    %v787 = vunpack.c.h.b16 %v534
    %v788 = vunpack.c.l.b16 %v535
    %v789 = vunpack.c.h.b16 %v535
    %v790 = vunpack.c.l.b16 %v536
    %v791 = vunpack.c.h.b16 %v536
    %v792 = vunpack.c.l.b16 %v537
    %v793 = vunpack.c.h.b16 %v537
    %v794 = vunpack.c.l.b16 %v538
    %v795 = vunpack.c.h.b16 %v538
    %v796 = vunpack.c.l.b16 %v539
    %v797 = vunpack.c.h.b16 %v539
    %v798 = vunpack.c.l.b16 %v540
    %v799 = vunpack.c.h.b16 %v540
    %v800 = vunpack.c.l.b16 %v541
    %v801 = vunpack.c.h.b16 %v541
    %v802 = vunpack.c.l.b16 %v542
    %v803 = vunpack.c.h.b16 %v542
    %v804 = vunpack.c.l.b16 %v543
    %v805 = vunpack.c.h.b16 %v543
    %v806 = vunpack.c.l.b16 %v544
    %v807 = vunpack.c.h.b16 %v544
    %v808 = vunpack.c.l.b16 %v545
    %v809 = vunpack.c.h.b16 %v545
    %v810 = vunpack.c.l.b16 %v546
    %v811 = vunpack.c.h.b16 %v546
    %v812 = vunpack.c.l.b16 %v547
    %v813 = vunpack.c.h.b16 %v547
    %v814 = vunpack.c.l.b16 %v548
    %v815 = vunpack.c.h.b16 %v548
    %v816 = vunpack.c.l.b16 %v549
    %v817 = vunpack.c.h.b16 %v549
    %v818 = vunpack.c.l.b16 %v550
    %v819 = vunpack.c.h.b16 %v550
    %v820 = vunpack.c.l.b16 %v551
    %v821 = vunpack.c.h.b16 %v551
    %v822 = vunpack.c.l.b16 %v552
    %v823 = vunpack.c.h.b16 %v552
    %v824 = vunpack.c.l.b16 %v553
    %v825 = vunpack.c.h.b16 %v553
    %v826 = vunpack.c.l.b16 %v554
    %v827 = vunpack.c.h.b16 %v554
    %v828 = vunpack.c.l.b16 %v555
    %v829 = vunpack.c.h.b16 %v555
    %v830 = vunpack.c.l.b16 %v556
    %v831 = vunpack.c.h.b16 %v556
    %v832 = vunpack.c.l.b16 %v557
    %v833 = vunpack.c.h.b16 %v557
    %v834 = vunpack.c.l.b16 %v558
    %v835 = vunpack.c.h.b16 %v558
    %v836 = vunpack.c.l.b16 %v559
    %v837 = vunpack.c.h.b16 %v559
    %v838 = vunpack.c.l.b16 %v560
    %v839 = vunpack.c.h.b16 %v560
    %v840 = vunpack.c.l.b16 %v561
    %v841 = vunpack.c.h.b16 %v561
    %v842 = vunpack.c.l.b16 %v562
    %v843 = vunpack.c.h.b16 %v562
    %v844 = vunpack.c.l.b16 %v563
    %v845 = vunpack.c.h.b16 %v563
    %v846 = vunpack.c.l.b16 %v564
    %v847 = vunpack.c.h.b16 %v564
    %v848 = vunpack.c.l.b16 %v565
    %v849 = vunpack.c.h.b16 %v565
    %v850 = vunpack.c.l.b16 %v566
    %v851 = vunpack.c.h.b16 %v566
    %v852 = vunpack.c.l.b16 %v567
    %v853 = vunpack.c.h.b16 %v567
    %v854 = vunpack.c.l.b16 %v568
    %v855 = vunpack.c.h.b16 %v568
    %v856 = vunpack.c.l.b16 %v569
    %v857 = vunpack.c.h.b16 %v569
    %v858 = vunpack.c.l.b16 %v570
    %v859 = vunpack.c.h.b16 %v570
    %v860 = vunpack.c.l.b16 %v571
    %v861 = vunpack.c.h.b16 %v571
    %v862 = vunpack.c.l.b16 %v572
    %v863 = vunpack.c.h.b16 %v572
    %v864 = vunpack.c.l.b16 %v573
    %v865 = vunpack.c.h.b16 %v573
    %v866 = vunpack.c.l.b16 %v574
    %v867 = vunpack.c.h.b16 %v574
    %v868 = vunpack.c.l.b16 %v575
    %v869 = vunpack.c.h.b16 %v575
    %v870 = vunpack.c.l.b16 %v576
    %v871 = vunpack.c.h.b16 %v576
    %v872 = vunpack.c.l.b16 %v577
    %v873 = vunpack.c.h.b16 %v577
    %v874 = vunpack.c.l.b16 %v578
    %v875 = vunpack.c.h.b16 %v578
    %v876 = vunpack.c.l.b16 %v579
    %v877 = vunpack.c.h.b16 %v579
    %v878 = vunpack.c.l.b16 %v580
    %v879 = vunpack.c.h.b16 %v580
    %v880 = vunpack.c.l.b16 %v581
    %v881 = vunpack.c.h.b16 %v581
    %v882 = vpack.c.b16 %v692, %v690
    %v883 = vpack.c.b16 %v693, %v691
    %v884 = vpack.c.b16 %v696, %v694
    %v885 = vpack.c.b16 %v697, %v695
    %v886 = vpack.c.b16 %v700, %v698
    %v887 = vpack.c.b16 %v701, %v699
    %v888 = vpack.c.b16 %v704, %v702
    %v889 = vpack.c.b16 %v705, %v703
    %v890 = vpack.c.b16 %v708, %v706
    %v891 = vpack.c.b16 %v709, %v707
    %v892 = vpack.c.b16 %v712, %v710
    %v893 = vpack.c.b16 %v713, %v711
    %v894 = vpack.c.b16 %v716, %v714
    %v895 = vpack.c.b16 %v717, %v715
    %v896 = vpack.c.b16 %v720, %v718
    %v897 = vpack.c.b16 %v721, %v719
    %v898 = vpack.c.b16 %v724, %v722
    %v899 = vpack.c.b16 %v725, %v723
    %v900 = vpack.c.b16 %v728, %v726
    %v901 = vpack.c.b16 %v729, %v727
    %v902 = vpack.c.b16 %v732, %v730
    %v903 = vpack.c.b16 %v733, %v731
    %v904 = vpack.c.b16 %v736, %v734
    %v905 = vpack.c.b16 %v737, %v735
    %v906 = vpack.c.b16 %v740, %v738
    %v907 = vpack.c.b16 %v741, %v739
    %v908 = vpack.c.b16 %v744, %v742
    %v909 = vpack.c.b16 %v745, %v743
    %v910 = vpack.c.b16 %v748, %v746
    %v911 = vpack.c.b16 %v749, %v747
    %v912 = vpack.c.b16 %v752, %v750
    %v913 = vpack.c.b16 %v753, %v751
    %v914 = vpack.c.b16 %v756, %v754
    %v915 = vpack.c.b16 %v757, %v755
    %v916 = vpack.c.b16 %v760, %v758
    %v917 = vpack.c.b16 %v761, %v759
    %v918 = vpack.c.b16 %v764, %v762
    %v919 = vpack.c.b16 %v765, %v763
    %v920 = vpack.c.b16 %v768, %v766
    %v921 = vpack.c.b16 %v769, %v767
    %v922 = vpack.c.b16 %v772, %v770
    %v923 = vpack.c.b16 %v773, %v771
    %v924 = vpack.c.b16 %v776, %v774
    %v925 = vpack.c.b16 %v777, %v775
    %v926 = vpack.c.b16 %v780, %v778
    %v927 = vpack.c.b16 %v781, %v779
    %v928 = vpack.c.b16 %v784, %v782
    %v929 = vpack.c.b16 %v785, %v783
    %v930 = vpack.c.b16 %v788, %v786
    %v931 = vpack.c.b16 %v789, %v787
    %v932 = vpack.c.b16 %v792, %v790
    %v933 = vpack.c.b16 %v793, %v791
    %v934 = vpack.c.b16 %v796, %v794
    %v935 = vpack.c.b16 %v797, %v795
    %v936 = vpack.c.b16 %v800, %v798
    %v937 = vpack.c.b16 %v801, %v799
    %v938 = vpack.c.b16 %v804, %v802
    %v939 = vpack.c.b16 %v805, %v803
    %v940 = vpack.c.b16 %v808, %v806
    %v941 = vpack.c.b16 %v809, %v807
    %v942 = vpack.c.b16 %v812, %v810
    %v943 = vpack.c.b16 %v813, %v811
    %v944 = vpack.c.b16 %v816, %v814
    %v945 = vpack.c.b16 %v817, %v815
    %v946 = vpack.c.b16 %v820, %v818
    %v947 = vpack.c.b16 %v821, %v819
    %v948 = vpack.c.b16 %v824, %v822
    %v949 = vpack.c.b16 %v825, %v823
    %v950 = vpack.c.b16 %v828, %v826
    %v951 = vpack.c.b16 %v829, %v827
    %v952 = vpack.c.b16 %v832, %v830
    %v953 = vpack.c.b16 %v833, %v831
    %v954 = vpack.c.b16 %v836, %v834
    %v955 = vpack.c.b16 %v837, %v835
    %v956 = vpack.c.b16 %v840, %v838
    %v957 = vpack.c.b16 %v841, %v839
    %v958 = vpack.c.b16 %v844, %v842
    %v959 = vpack.c.b16 %v845, %v843
    %v960 = vpack.c.b16 %v848, %v846
    %v961 = vpack.c.b16 %v849, %v847
    %v962 = vpack.c.b16 %v852, %v850
    %v963 = vpack.c.b16 %v853, %v851
    %v964 = vpack.c.b16 %v856, %v854
    %v965 = vpack.c.b16 %v857, %v855
    %v966 = vpack.c.b16 %v860, %v858
    %v967 = vpack.c.b16 %v861, %v859
    %v968 = vpack.c.b16 %v864, %v862
    %v969 = vpack.c.b16 %v865, %v863
    %v970 = vpack.c.b16 %v868, %v866
    %v971 = vpack.c.b16 %v869, %v867
    %v972 = vpack.c.b16 %v872, %v870
    %v973 = vpack.c.b16 %v873, %v871
    %v974 = vpack.c.b16 %v876, %v874
    %v975 = vpack.c.b16 %v877, %v875
    %v976 = vpack.c.b16 %v880, %v878
    %v977 = vpack.c.b16 %v881, %v879
    %1074 = vmatprep.subr.bf16.mxu0 %v883
    %1075 = vmatpush1.bf16.msra.mxu0 %v882
    %1076 = vmatprep.subr.bf16.mxu0 %v885
    %1077 = vmatpush1.bf16.msra.mxu0 %v884
    %1078 = vmatprep.subr.bf16.mxu0 %v887
    %1079 = vmatpush1.bf16.msra.mxu0 %v886
    %1080 = vmatprep.subr.bf16.mxu0 %v889
    %1081 = vmatpush1.bf16.msra.mxu0 %v888
    %1082 = vmatprep.subr.bf16.mxu0 %v891
    %1083 = vmatpush1.bf16.msra.mxu0 %v890
    %1084 = vmatprep.subr.bf16.mxu0 %v893
    %1085 = vmatpush1.bf16.msra.mxu0 %v892
    %1086 = vmatprep.subr.bf16.mxu0 %v895
    %1087 = vmatpush1.bf16.msra.mxu0 %v894
    %1088 = vmatprep.subr.bf16.mxu0 %v897
    %1089 = vmatpush1.bf16.msra.mxu0 %v896
    %1090 = vmatprep.subr.bf16.mxu0 %v899
    %1091 = vmatpush1.bf16.msra.mxu0 %v898
    %1092 = vmatprep.subr.bf16.mxu0 %v901
    %1093 = vmatpush1.bf16.msra.mxu0 %v900
    %1094 = vmatprep.subr.bf16.mxu0 %v903
    %1095 = vmatpush1.bf16.msra.mxu0 %v902
    %1096 = vmatprep.subr.bf16.mxu0 %v905
    %1097 = vmatpush1.bf16.msra.mxu0 %v904
    %1098 = vmatprep.subr.bf16.mxu0 %v907
    %1099 = vmatpush1.bf16.msra.mxu0 %v906
    %1100 = vmatprep.subr.bf16.mxu0 %v909
    %1101 = vmatpush1.bf16.msra.mxu0 %v908
    %1102 = vmatprep.subr.bf16.mxu0 %v911
    %1103 = vmatpush1.bf16.msra.mxu0 %v910
    %1104 = vmatprep.subr.bf16.mxu0 %v913
    %1105 = vmatpush1.bf16.msra.mxu0 %v912
    %1106 = vmatprep.mubr.bf16.mxu0 %v481
    %1107 = vmatmul.mubr.bf16.gmra.mrb[0].mxu0 %v480
    %v1108 = vpop.f32.mrb[0].mxu0
    %v1109 = vadd.f32 %v587, %v1108
    %v1110 = vpop.f32.mrb[0].mxu0
    %v1111 = vadd.f32 %v591, %v1110
    %v1112 = vpop.f32.mrb[0].mxu0
    %v1113 = vpop.f32.mrb[0].mxu0
    %1114 = vdwg.mxu0
    %1115 = vmatprep.subr.bf16.mxu0 %v915
    %1116 = vmatpush1.bf16.msra.mxu0 %v914
    %1117 = vmatprep.subr.bf16.mxu0 %v917
    %1118 = vmatpush1.bf16.msra.mxu0 %v916
    %1119 = vmatprep.subr.bf16.mxu0 %v919
    %1120 = vmatpush1.bf16.msra.mxu0 %v918
    %1121 = vmatprep.subr.bf16.mxu0 %v921
    %1122 = vmatpush1.bf16.msra.mxu0 %v920
    %1123 = vmatprep.subr.bf16.mxu0 %v923
    %1124 = vmatpush1.bf16.msra.mxu0 %v922
    %1125 = vmatprep.subr.bf16.mxu0 %v925
    %1126 = vmatpush1.bf16.msra.mxu0 %v924
    %1127 = vmatprep.subr.bf16.mxu0 %v927
    %1128 = vmatpush1.bf16.msra.mxu0 %v926
    %1129 = vmatprep.subr.bf16.mxu0 %v929
    %1130 = vmatpush1.bf16.msra.mxu0 %v928
    %1131 = vmatprep.subr.bf16.mxu0 %v931
    %1132 = vmatpush1.bf16.msra.mxu0 %v930
    %1133 = vmatprep.subr.bf16.mxu0 %v933
    %1134 = vmatpush1.bf16.msra.mxu0 %v932
    %1135 = vmatprep.subr.bf16.mxu0 %v935
    %1136 = vmatpush1.bf16.msra.mxu0 %v934
    %1137 = vmatprep.subr.bf16.mxu0 %v937
    %1138 = vmatpush1.bf16.msra.mxu0 %v936
    %1139 = vmatprep.subr.bf16.mxu0 %v939
    %1140 = vmatpush1.bf16.msra.mxu0 %v938
    %1141 = vmatprep.subr.bf16.mxu0 %v941
    %1142 = vmatpush1.bf16.msra.mxu0 %v940
    %1143 = vmatprep.subr.bf16.mxu0 %v943
    %1144 = vmatpush1.bf16.msra.mxu0 %v942
    %1145 = vmatprep.subr.bf16.mxu0 %v945
    %1146 = vmatpush1.bf16.msra.mxu0 %v944
    %1147 = vmatprep.mubr.bf16.mxu0 %v483
    %1148 = vmatmul.mubr.bf16.gmra.mrb[0].mxu0 %v482
    %v1149 = vpop.f32.mrb[0].mxu0
    %v1150 = vadd.f32 %v1109, %v1149
    %v1151 = vpop.f32.mrb[0].mxu0
    %v1152 = vadd.f32 %v1111, %v1151
    %v1153 = vpop.f32.mrb[0].mxu0
    %v1154 = vpop.f32.mrb[0].mxu0
    %1155 = vdwg.mxu0
    %1156 = vmatprep.subr.bf16.mxu0 %v947
    %1157 = vmatpush1.bf16.msra.mxu0 %v946
    %1158 = vmatprep.subr.bf16.mxu0 %v949
    %1159 = vmatpush1.bf16.msra.mxu0 %v948
    %1160 = vmatprep.subr.bf16.mxu0 %v951
    %1161 = vmatpush1.bf16.msra.mxu0 %v950
    %1162 = vmatprep.subr.bf16.mxu0 %v953
    %1163 = vmatpush1.bf16.msra.mxu0 %v952
    %1164 = vmatprep.subr.bf16.mxu0 %v955
    %1165 = vmatpush1.bf16.msra.mxu0 %v954
    %1166 = vmatprep.subr.bf16.mxu0 %v957
    %1167 = vmatpush1.bf16.msra.mxu0 %v956
    %1168 = vmatprep.subr.bf16.mxu0 %v959
    %1169 = vmatpush1.bf16.msra.mxu0 %v958
    %1170 = vmatprep.subr.bf16.mxu0 %v961
    %1171 = vmatpush1.bf16.msra.mxu0 %v960
    %1172 = vmatprep.subr.bf16.mxu0 %v963
    %1173 = vmatpush1.bf16.msra.mxu0 %v962
    %1174 = vmatprep.subr.bf16.mxu0 %v965
    %1175 = vmatpush1.bf16.msra.mxu0 %v964
    %1176 = vmatprep.subr.bf16.mxu0 %v967
    %1177 = vmatpush1.bf16.msra.mxu0 %v966
    %1178 = vmatprep.subr.bf16.mxu0 %v969
    %1179 = vmatpush1.bf16.msra.mxu0 %v968
    %1180 = vmatprep.subr.bf16.mxu0 %v971
    %1181 = vmatpush1.bf16.msra.mxu0 %v970
    %1182 = vmatprep.subr.bf16.mxu0 %v973
    %1183 = vmatpush1.bf16.msra.mxu0 %v972
    %1184 = vmatprep.subr.bf16.mxu0 %v975
    %1185 = vmatpush1.bf16.msra.mxu0 %v974
    %1186 = vmatprep.subr.bf16.mxu0 %v977
    %1187 = vmatpush1.bf16.msra.mxu0 %v976
    %1188 = vmatprep.mubr.bf16.mxu0 %v485
    %1189 = vmatmul.mubr.bf16.gmra.mrb[0].mxu0 %v484
    %v1190 = vpop.f32.mrb[0].mxu0
    %v1191 = vadd.f32 %v1150, %v1190
    %v1192 = vpop.f32.mrb[0].mxu0
    %v1193 = vadd.f32 %v1152, %v1192
    %v1194 = vpop.f32.mrb[0].mxu0
    %v1195 = vpop.f32.mrb[0].mxu0
    %1196 = vdwg.mxu0
    %v1197 = vmax.f32 %v1191, 0.0
    %v1198 = vmax.f32 %v1193, 0.0
    %v1199 = vpack.c.bf16 %v1197, %v1197
    %v1200 = vpack.c.bf16 %v1198, %v1198
    %v1201 = vld [vmem:[#allocation7] sm:$0xf]
    %v1202 = vld [vmem:[#allocation7 + $0x4] sm:$0xf]
    %v1203 = vld [vmem:[#allocation7 + $0x8] sm:$0xf]
    %v1204 = vld [vmem:[#allocation7 + $0xc] sm:$0xf]
    %v1205 = vld [vmem:[#allocation7 + $0x10] sm:$0xf]
    %v1206 = vld [vmem:[#allocation7 + $0x14] sm:$0xf]
    %v1207 = vld [vmem:[#allocation7 + $0x18] sm:$0xf]
    %v1208 = vld [vmem:[#allocation7 + $0x1c] sm:$0xf]
    %v1209 = vld [vmem:[#allocation7 + $0x20] sm:$0xf]
    %v1210 = vld [vmem:[#allocation7 + $0x24] sm:$0xf]
    %v1211 = vld [vmem:[#allocation7 + $0x28] sm:$0xf]
    %v1212 = vld [vmem:[#allocation7 + $0x2c] sm:$0xf]
    %v1213 = vld [vmem:[#allocation7 + $0x30] sm:$0xf]
    %v1214 = vld [vmem:[#allocation7 + $0x34] sm:$0xf]
    %v1215 = vld [vmem:[#allocation7 + $0x38] sm:$0xf]
    %v1216 = vld [vmem:[#allocation7 + $0x3c] sm:$0xf]
    %v1217 = vld [vmem:[#allocation7 + $0x40] sm:$0xf]
    %v1218 = vld [vmem:[#allocation7 + $0x44] sm:$0xf]
    %v1219 = vld [vmem:[#allocation7 + $0x48] sm:$0xf]
    %v1220 = vld [vmem:[#allocation7 + $0x4c] sm:$0xf]
    %v1221 = vld [vmem:[#allocation7 + $0x50] sm:$0xf]
    %v1222 = vld [vmem:[#allocation7 + $0x54] sm:$0xf]
    %v1223 = vld [vmem:[#allocation7 + $0x58] sm:$0xf]
    %v1224 = vld [vmem:[#allocation7 + $0x5c] sm:$0xf]
    %v1225 = vld [vmem:[#allocation7 + $0x60] sm:$0xf]
    %v1226 = vld [vmem:[#allocation7 + $0x64] sm:$0xf]
    %v1227 = vld [vmem:[#allocation7 + $0x68] sm:$0xf]
    %v1228 = vld [vmem:[#allocation7 + $0x6c] sm:$0xf]
    %v1229 = vld [vmem:[#allocation7 + $0x70] sm:$0xf]
    %v1230 = vld [vmem:[#allocation7 + $0x74] sm:$0xf]
    %v1231 = vld [vmem:[#allocation7 + $0x78] sm:$0xf]
    %v1232 = vld [vmem:[#allocation7 + $0x7c] sm:$0xf]
    %v1233 = vld [vmem:[%s8] sm:$0x1]
    %v1235 = vlaneseq
    %v1236 = vshrl.u32 %v1235, 7
    %v1237 = vsub.s32 0, %v1236
    %v1238 = vrot.slane %v1233, %v1237
    %v1272 = vunpack.c.l.b16 %v1201
    %v1273 = vunpack.c.l.b16 %v1202
    %v1274 = vunpack.c.l.b16 %v1203
    %v1275 = vunpack.c.l.b16 %v1204
    %v1276 = vunpack.c.l.b16 %v1205
    %v1277 = vunpack.c.l.b16 %v1206
    %v1278 = vunpack.c.l.b16 %v1207
    %v1279 = vunpack.c.l.b16 %v1208
    %v1280 = vunpack.c.l.b16 %v1209
    %v1281 = vunpack.c.l.b16 %v1210
    %v1282 = vunpack.c.l.b16 %v1211
    %v1283 = vunpack.c.l.b16 %v1212
    %v1284 = vunpack.c.l.b16 %v1213
    %v1285 = vunpack.c.l.b16 %v1214
    %v1286 = vunpack.c.l.b16 %v1215
    %v1287 = vunpack.c.l.b16 %v1216
    %v1288 = vunpack.c.l.b16 %v1217
    %v1289 = vunpack.c.l.b16 %v1218
    %v1290 = vunpack.c.l.b16 %v1219
    %v1291 = vunpack.c.l.b16 %v1220
    %v1292 = vunpack.c.l.b16 %v1221
    %v1293 = vunpack.c.l.b16 %v1222
    %v1294 = vunpack.c.l.b16 %v1223
    %v1295 = vunpack.c.l.b16 %v1224
    %v1296 = vunpack.c.l.b16 %v1225
    %v1297 = vunpack.c.l.b16 %v1226
    %v1298 = vunpack.c.l.b16 %v1227
    %v1299 = vunpack.c.l.b16 %v1228
    %v1300 = vunpack.c.l.b16 %v1229
    %v1301 = vunpack.c.l.b16 %v1230
    %v1302 = vunpack.c.l.b16 %v1231
    %v1303 = vunpack.c.l.b16 %v1232
    %v1304 = vpack.c.b16 %v1273, %v1272
    %v1305 = vpack.c.b16 %v1275, %v1274
    %v1306 = vpack.c.b16 %v1277, %v1276
    %v1307 = vpack.c.b16 %v1279, %v1278
    %v1308 = vpack.c.b16 %v1281, %v1280
    %v1309 = vpack.c.b16 %v1283, %v1282
    %v1310 = vpack.c.b16 %v1285, %v1284
    %v1311 = vpack.c.b16 %v1287, %v1286
    %v1312 = vpack.c.b16 %v1289, %v1288
    %v1313 = vpack.c.b16 %v1291, %v1290
    %v1314 = vpack.c.b16 %v1293, %v1292
    %v1315 = vpack.c.b16 %v1295, %v1294
    %v1316 = vpack.c.b16 %v1297, %v1296
    %v1317 = vpack.c.b16 %v1299, %v1298
    %v1318 = vpack.c.b16 %v1301, %v1300
    %v1319 = vpack.c.b16 %v1303, %v1302
    %1336 = vmatprep.subr.bf16.mxu0 0
    %1337 = vmatpush1.bf16.msra.mxu0 %v1304
    %1338 = vmatprep.subr.bf16.mxu0 0
    %1339 = vmatpush1.bf16.msra.mxu0 %v1305
    %1340 = vmatprep.subr.bf16.mxu0 0
    %1341 = vmatpush1.bf16.msra.mxu0 %v1306
    %1342 = vmatprep.subr.bf16.mxu0 0
    %1343 = vmatpush1.bf16.msra.mxu0 %v1307
    %1344 = vmatprep.subr.bf16.mxu0 0
    %1345 = vmatpush1.bf16.msra.mxu0 %v1308
    %1346 = vmatprep.subr.bf16.mxu0 0
    %1347 = vmatpush1.bf16.msra.mxu0 %v1309
    %1348 = vmatprep.subr.bf16.mxu0 0
    %1349 = vmatpush1.bf16.msra.mxu0 %v1310
    %1350 = vmatprep.subr.bf16.mxu0 0
    %1351 = vmatpush1.bf16.msra.mxu0 %v1311
    %1352 = vmatprep.subr.bf16.mxu0 0
    %1353 = vmatpush1.bf16.msra.mxu0 %v1312
    %1354 = vmatprep.subr.bf16.mxu0 0
    %1355 = vmatpush1.bf16.msra.mxu0 %v1313
    %1356 = vmatprep.subr.bf16.mxu0 0
    %1357 = vmatpush1.bf16.msra.mxu0 %v1314
    %1358 = vmatprep.subr.bf16.mxu0 0
    %1359 = vmatpush1.bf16.msra.mxu0 %v1315
    %1360 = vmatprep.subr.bf16.mxu0 0
    %1361 = vmatpush1.bf16.msra.mxu0 %v1316
    %1362 = vmatprep.subr.bf16.mxu0 0
    %1363 = vmatpush1.bf16.msra.mxu0 %v1317
    %1364 = vmatprep.subr.bf16.mxu0 0
    %1365 = vmatpush1.bf16.msra.mxu0 %v1318
    %1366 = vmatprep.subr.bf16.mxu0 0
    %1367 = vmatpush1.bf16.msra.mxu0 %v1319
    %1368 = vmatprep.mubr.bf16.mxu0 %v1200
    %1369 = vmatmul.mubr.bf16.gmra.mrb[0].mxu0 %v1199
    %v1370 = vpop.f32.mrb[0].mxu0
    %v1371 = vadd.f32 %v1238, %v1370
    %v1372 = vpop.f32.mrb[0].mxu0
    %v1373 = vpop.f32.mrb[0].mxu0
    %v1374 = vpop.f32.mrb[0].mxu0
    %1375 = vdwg.mxu0
    %v1376 = vmax.f32 %v1371, 0.0
    %v1377 = vpack.c.bf16 %v1376, %v1376
    %v1378 = vld [vmem:[%s9] sm:$0xf]
    %v1379 = vld [vmem:[%s9 + $0x4] sm:$0xf]
    %v1380 = vld [vmem:[%s9 + $0x8] sm:$0xf]
    %v1381 = vld [vmem:[%s9 + $0xc] sm:$0xf]
    %v1382 = vld [vmem:[%s9 + $0x10] sm:$0xf]
    %v1383 = vld [vmem:[%s9 + $0x14] sm:$0xf]
    %v1384 = vld [vmem:[%s9 + $0x18] sm:$0xf]
    %v1385 = vld [vmem:[%s9 + $0x1c] sm:$0xf]
    %v1386 = vld [vmem:[%s9 + $0x20] sm:$0xf]
    %v1387 = vld [vmem:[%s9 + $0x24] sm:$0xf]
    %v1388 = vld [vmem:[%s9 + $0x28] sm:$0xf]
    %v1389 = vld [vmem:[%s9 + $0x2c] sm:$0xf]
    %v1390 = vld [vmem:[%s9 + $0x30] sm:$0xf]
    %v1391 = vld [vmem:[%s9 + $0x34] sm:$0xf]
    %v1392 = vld [vmem:[%s9 + $0x38] sm:$0xf]
    %v1393 = vld [vmem:[%s9 + $0x3c] sm:$0xf]
    %v1394 = vld [vmem:[#allocation2] sm:$0x1]
    %v1396 = vlaneseq
    %v1397 = vshrl.u32 %v1396, 7
    %v1398 = vsub.s32 0, %v1397
    %v1399 = vrot.slane %v1394, %v1398
    %v1417 = vunpack.c.l.b16 %v1378
    %v1418 = vunpack.c.l.b16 %v1379
    %v1419 = vunpack.c.l.b16 %v1380
    %v1420 = vunpack.c.l.b16 %v1381
    %v1421 = vunpack.c.l.b16 %v1382
    %v1422 = vunpack.c.l.b16 %v1383
    %v1423 = vunpack.c.l.b16 %v1384
    %v1424 = vunpack.c.l.b16 %v1385
    %v1425 = vunpack.c.l.b16 %v1386
    %v1426 = vunpack.c.l.b16 %v1387
    %v1427 = vunpack.c.l.b16 %v1388
    %v1428 = vunpack.c.l.b16 %v1389
    %v1429 = vunpack.c.l.b16 %v1390
    %v1430 = vunpack.c.l.b16 %v1391
    %v1431 = vunpack.c.l.b16 %v1392
    %v1432 = vunpack.c.l.b16 %v1393
    %v1433 = vpack.c.b16 %v1418, %v1417
    %v1434 = vpack.c.b16 %v1420, %v1419
    %v1435 = vpack.c.b16 %v1422, %v1421
    %v1436 = vpack.c.b16 %v1424, %v1423
    %v1437 = vpack.c.b16 %v1426, %v1425
    %v1438 = vpack.c.b16 %v1428, %v1427
    %v1439 = vpack.c.b16 %v1430, %v1429
    %v1440 = vpack.c.b16 %v1432, %v1431
    %1449 = vmatprep.subr.bf16.mxu0 0
    %1450 = vmatpush1.bf16.msra.mxu0 %v1433
    %1451 = vmatprep.subr.bf16.mxu0 0
    %1452 = vmatpush1.bf16.msra.mxu0 %v1434
    %1453 = vmatprep.subr.bf16.mxu0 0
    %1454 = vmatpush1.bf16.msra.mxu0 %v1435
    %1455 = vmatprep.subr.bf16.mxu0 0
    %1456 = vmatpush1.bf16.msra.mxu0 %v1436
    %1457 = vmatprep.subr.bf16.mxu0 0
    %1458 = vmatpush1.bf16.msra.mxu0 %v1437
    %1459 = vmatprep.subr.bf16.mxu0 0
    %1460 = vmatpush1.bf16.msra.mxu0 %v1438
    %1461 = vmatprep.subr.bf16.mxu0 0
    %1462 = vmatpush1.bf16.msra.mxu0 %v1439
    %1463 = vmatprep.subr.bf16.mxu0 0
    %1464 = vmatpush1.bf16.msra.mxu0 %v1440
    %1465 = vmatprep.subr.bf16.mxu0 0
    %1466 = vmatpush1.bf16.msra.mxu0 0
    %1467 = vmatprep.subr.bf16.mxu0 0
    %1468 = vmatpush1.bf16.msra.mxu0 0
    %1469 = vmatprep.subr.bf16.mxu0 0
    %1470 = vmatpush1.bf16.msra.mxu0 0
    %1471 = vmatprep.subr.bf16.mxu0 0
    %1472 = vmatpush1.bf16.msra.mxu0 0
    %1473 = vmatprep.subr.bf16.mxu0 0
    %1474 = vmatpush1.bf16.msra.mxu0 0
    %1475 = vmatprep.subr.bf16.mxu0 0
    %1476 = vmatpush1.bf16.msra.mxu0 0
    %1477 = vmatprep.subr.bf16.mxu0 0
    %1478 = vmatpush1.bf16.msra.mxu0 0
    %1479 = vmatprep.subr.bf16.mxu0 0
    %1480 = vmatpush1.bf16.msra.mxu0 0
    %1481 = vmatprep.mubr.bf16.mxu0 0
    %1482 = vmatmul.mubr.bf16.gmra.mrb[0].mxu0 %v1377
    %v1483 = vpop.f32.mrb[0].mxu0
    %v1484 = vadd.f32 %v1399, %v1483
    %v1485 = vpop.f32.mrb[0].mxu0
    %v1486 = vpop.f32.mrb[0].mxu0
    %v1487 = vpop.f32.mrb[0].mxu0
    %1488 = vdwg.mxu0
    %v1489 = vxor.u32 %v1484, 2147483648
    %v1490 = vmul.f32 %v1489, 1.442695
    %v1491 = vpow.pop %v1490
    %v1492 = vadd.f32 %v1491, 1.0
    %v1493 = vrcp.pop %v1492
    %v1494 = vmul.f32 1.0, %v1493
    %vm1495 = vcmask 7168
    %1496 = vst.msk [vmem:[%s11] sm:$0xff] %vm1495, %v1494
    // Predicated region
    $region58: #{tpu_custom_call.1} parent=1 // pred_check
      _
    $region59: #{tpu_custom_call.1} parent=1 // pred_check_branch
      %1498 = sbr.rel (0) target = $region61
    $region60: #{tpu_custom_call.1} parent=1 // pred_region
      _
    $region61: #{tpu_custom_call.1} parent=1 // pred_fallthru
      _
    // Predicated region
    $region62: #{tpu_custom_call.1} parent=1 // pred_check
      _
    $region63: #{tpu_custom_call.1} parent=1 // pred_check_branch
      %1500 = sbr.rel (0) target = $region65
    $region64: #{tpu_custom_call.1} parent=1 // pred_region
      _
    $region65: #{tpu_custom_call.1} parent=1 // pred_fallthru
      _
    %1501 = vsyncpa [#allocation4], 1
    %1502 = vsyncpa [#allocation6], 1

</llo_original>
